<compile_context>
chip_gen: v5e
topology: v5e:2x2
jax: 0.10.0
libtpu: 0.0.40
codegen_flags: <defaults>
</compile_context>

<pallas_src>
import jax
import jax.numpy as jnp
from jax.experimental import pallas as pl
from jax.experimental.pallas import tpu as pltpu


LANE = 128  # TPU lane width: hidden dims are padded to this for lane-dense vregs


def _round_up(x, m):
    return ((x + m - 1) // m) * m


def _prelu(h, a):
    # per-channel PReLU (PyTorch semantics): h if h >= 0 else a * h
    return jnp.where(h >= 0.0, h, h * a)


def mlp_kernel(x_ref,
               w1_ref, b1_ref, a1_ref,
               w2_ref, b2_ref, a2_ref,
               w3_ref, b3_ref, a3_ref,
               w4_ref, b4_ref,
               o_ref):
    # Matmul operands use the weights' storage dtype (f32 or bf16); the MXU
    # accumulates in f32 and all elementwise PReLU math stays in f32.
    mm_dtype = w1_ref.dtype

    h = jnp.dot(x_ref[...].astype(mm_dtype), w1_ref[...],
                preferred_element_type=jnp.float32) + b1_ref[...]
    h = _prelu(h, a1_ref[...])

    h = jnp.dot(h.astype(mm_dtype), w2_ref[...],
                preferred_element_type=jnp.float32) + b2_ref[...]
    h = _prelu(h, a2_ref[...])

    h = jnp.dot(h.astype(mm_dtype), w3_ref[...],
                preferred_element_type=jnp.float32) + b3_ref[...]
    h = _prelu(h, a3_ref[...])

    h = jnp.dot(h.astype(mm_dtype), w4_ref[...],
                preferred_element_type=jnp.float32) + b4_ref[...]

    o_ref[...] = h.astype(o_ref.dtype)


def _pad_params(params, matmul_dtype):
    """Zero-pad hidden feature dims to multiples of 128 lanes.

    Padded channels are exactly 0 through every layer (0-weights, 0-bias), so
    the result is bit-identical on the real channels.
    """
    (w1, b1, a1, w2, b2, a2, w3, b3, a3, w4, b4) = params
    in_f = w1.shape[0]
    h1, h2, h3 = w1.shape[1], w2.shape[1], w3.shape[1]
    out_f = w4.shape[1]
    H1, H2, H3 = (_round_up(d, LANE) for d in (h1, h2, h3))

    def pad_w(w, rows, cols):
        return jnp.pad(w, ((0, rows - w.shape[0]), (0, cols - w.shape[1])))

    def pad_row(v, cols, fill=0.0):
        return jnp.pad(v, ((0, 0), (0, cols - v.shape[1])), constant_values=fill)

    w1p = pad_w(w1, in_f, H1).astype(matmul_dtype)
    w2p = pad_w(w2, H1, H2).astype(matmul_dtype)
    w3p = pad_w(w3, H2, H3).astype(matmul_dtype)
    w4p = pad_w(w4, H3, out_f).astype(matmul_dtype)
    b1p = pad_row(b1, H1).astype(jnp.float32)
    b2p = pad_row(b2, H2).astype(jnp.float32)
    b3p = pad_row(b3, H3).astype(jnp.float32)
    b4p = b4.astype(jnp.float32)
    # PReLU slope padding value is irrelevant (padded channels are exactly 0).
    a1p = pad_row(a1, H1, fill=0.25).astype(jnp.float32)
    a2p = pad_row(a2, H2, fill=0.25).astype(jnp.float32)
    a3p = pad_row(a3, H3, fill=0.25).astype(jnp.float32)
    return (w1p, b1p, a1p, w2p, b2p, a2p, w3p, b3p, a3p, w4p, b4p)


def _choose_tile_m(M, row_align):
    """Pick a row tile.

    Per-grid-step overhead (~0.35 us) rivals the per-step x/out DMA time for
    small tiles on this tiny-feature MLP, so large M gets large tiles (up to
    4096 rows, ~25 MiB VMEM footprint incl. double buffers & f32 hiddens);
    small M gets ~M/2 so there are still >=2 grid steps when possible.
    """
    if M >= 32768:
        t = 4096
    elif M >= 8192:
        t = 2048
    elif M >= 2048:
        t = 1024
    elif M >= 512:
        t = 256
    else:
        t = max(1, (M + 1) // 2)
    return max(row_align, _round_up(t, row_align))


def mlp_forward(x, params, *, tile_m=None, use_bf16=False):
    """x: (..., in_features). Returns same leading dims with last dim = out_features."""
    orig_shape = x.shape
    in_features = orig_shape[-1]
    x2d = x.reshape(-1, in_features)
    M = x2d.shape[0]

    matmul_dtype = jnp.bfloat16 if use_bf16 else jnp.float32
    # sublane granularity of the row tile: 8 for f32, 16 for bf16 inputs
    row_align = 16 if use_bf16 else 8

    padded = _pad_params(params, matmul_dtype)
    out_features = padded[9].shape[1]      # w4 cols (output width is NOT padded)

    if tile_m is None:
        tile_m = _choose_tile_m(M, row_align)
    tile_m = max(row_align, _round_up(tile_m, row_align))

    # Pad M to a tile multiple instead of asserting divisibility.
    M_pad = _round_up(max(M, tile_m), tile_m)
    if M_pad != M:
        x2d = jnp.pad(x2d, ((0, M_pad - M), (0, 0)))
    if use_bf16:
        x2d = x2d.astype(jnp.bfloat16)     # halves HBM bytes for the x stream

    grid = (M_pad // tile_m,)

    def row_map(i):
        return (i, 0)

    def full_map(i):
        return (0, 0)

    in_specs = [pl.BlockSpec((tile_m, in_features), row_map)]
    in_specs += [pl.BlockSpec(p.shape, full_map) for p in padded]
    out_specs = pl.BlockSpec((tile_m, out_features), row_map)

    # --- advisory cost estimate (helps XLA schedule around the custom call) ---
    w_dims = [padded[i].shape for i in (0, 3, 6, 9)]
    flops = 2 * M_pad * sum(r * c for r, c in w_dims)
    in_itemsize = jnp.dtype(matmul_dtype).itemsize
    out_itemsize = jnp.dtype(x.dtype).itemsize
    weight_bytes = sum(int(p.size) * p.dtype.itemsize for p in padded)
    bytes_accessed = int(M_pad * in_features * in_itemsize
                         + M_pad * out_features * out_itemsize
                         + weight_bytes)
    cost = pl.CostEstimate(flops=int(flops), transcendentals=0,
                           bytes_accessed=bytes_accessed)

    # --- explicit VMEM budget (generous ~2x margin; capped for v7x's 64 MiB) ---
    H_max = max(padded[i].shape[1] for i in (0, 3, 6))
    io_bytes = 2 * tile_m * (in_features * in_itemsize + out_features * out_itemsize)
    interm_bytes = 6 * tile_m * H_max * 4              # h1..h3 + temporaries (f32)
    budget = 2 * (io_bytes + 2 * weight_bytes) + interm_bytes + interm_bytes // 2
    vmem_limit = int(min(max(budget, 16 * 1024 * 1024), 64 * 1024 * 1024))

    out = pl.pallas_call(
        mlp_kernel,
        out_shape=jax.ShapeDtypeStruct((M_pad, out_features), x.dtype),
        grid_spec=pltpu.PrefetchScalarGridSpec(
            num_scalar_prefetch=0,
            grid=grid,
            in_specs=in_specs,
            out_specs=out_specs,
        ),
        compiler_params=pltpu.CompilerParams(
            dimension_semantics=("parallel",),
            vmem_limit_bytes=vmem_limit,
        ),
        cost_estimate=cost,
    )(x2d, *padded)

    if M_pad != M:
        out = out[:M]
    return out.reshape(*orig_shape[:-1], out_features)


def init_params(key, in_features, hidden_features, out_features, dtype=jnp.float32):
    """Deterministic synthetic init. Weights ~ uniform(-1/sqrt(fan_in), +),
    like nn.Linear; PReLU slopes = 0.25 (PyTorch default)."""
    dims = [in_features, hidden_features[0], hidden_features[1],
            hidden_features[2], out_features]
    keys = jax.random.split(key, 8)
    params = []
    ki = 0
    for layer in range(4):
        fan_in, fan_out = dims[layer], dims[layer + 1]
        bound = 1.0 / (fan_in ** 0.5)
        w = jax.random.uniform(keys[ki], (fan_in, fan_out), dtype,
                               minval=-bound, maxval=bound)
        ki += 1
        b = jax.random.uniform(keys[ki], (1, fan_out), dtype,
                               minval=-bound, maxval=bound)
        ki += 1
        params.append(w)
        params.append(b)
        if layer < 3:
            params.append(jnp.full((1, fan_out), 0.25, dtype))  # PReLU slope
    return tuple(params)


def mlp_reference(x, params):
    (w1, b1, a1, w2, b2, a2, w3, b3, a3, w4, b4) = params
    h = x @ w1 + b1
    h = _prelu(h, a1)
    h = h @ w2 + b2
    h = _prelu(h, a2)
    h = h @ w3 + b3
    h = _prelu(h, a3)
    return h @ w4 + b4


if __name__ == "__main__":
    key = jax.random.PRNGKey(0)
    k_x, k_p = jax.random.split(key)

    B, N = 2, 8
    in_features = 32
    hidden_features = [64, 48, 64]
    out_features = 32

    x = jax.random.normal(k_x, (B, N, in_features), jnp.float32)
    params = init_params(k_p, in_features, hidden_features, out_features)

    # f32 path (default): must match the pure-JAX reference tightly.
    y = jax.block_until_ready(mlp_forward(x, params))
    y_ref = mlp_reference(x.reshape(-1, in_features), params).reshape(B, N, out_features)
    assert y.shape == (B, N, out_features)
    assert jnp.allclose(y, y_ref, atol=1e-4, rtol=1e-4), "f32 mismatch vs reference"

    # bf16-operand path (bandwidth-optimized for v6e/v7x); loose tolerance.
    y_bf16 = jax.block_until_ready(mlp_forward(x, params, use_bf16=True))
    assert y_bf16.shape == (B, N, out_features)
    assert jnp.allclose(y_bf16.astype(jnp.float32), y_ref, atol=3e-1, rtol=1e-1), \
        "bf16 mismatch vs reference"

    # Larger, non-tile-divisible M to exercise real multi-step tiling + padded tail.
    x_big = jax.random.normal(k_x, (3, 700, in_features), jnp.float32)
    y_big = jax.block_until_ready(mlp_forward(x_big, params))
    y_big_ref = mlp_reference(
        x_big.reshape(-1, in_features), params).reshape(3, 700, out_features)
    assert jnp.allclose(y_big, y_big_ref, atol=1e-4, rtol=1e-4), \
        "tiled mismatch vs reference"

    # TODO(synk): nn.Dropout (drop1) is defined in the module but never applied
    # in forward(), so it is intentionally not implemented.

    print("KERNEL_OK")
</pallas_src>

<mosaic_0001>
module attributes {stable_mosaic.version = 11 : i64} {
  func.func @mlp_kernel(%arg0: i32, %arg1: memref<8x32xf32, #tpu.memory_space<vmem>>, %arg2: memref<32x128xf32, #tpu.memory_space<vmem>>, %arg3: memref<1x128xf32, #tpu.memory_space<vmem>>, %arg4: memref<1x128xf32, #tpu.memory_space<vmem>>, %arg5: memref<128x128xf32, #tpu.memory_space<vmem>>, %arg6: memref<1x128xf32, #tpu.memory_space<vmem>>, %arg7: memref<1x128xf32, #tpu.memory_space<vmem>>, %arg8: memref<128x128xf32, #tpu.memory_space<vmem>>, %arg9: memref<1x128xf32, #tpu.memory_space<vmem>>, %arg10: memref<1x128xf32, #tpu.memory_space<vmem>>, %arg11: memref<128x32xf32, #tpu.memory_space<vmem>>, %arg12: memref<1x32xf32, #tpu.memory_space<vmem>>, %arg13: memref<8x32xf32, #tpu.memory_space<vmem>>) attributes {dimension_semantics = [#tpu.dimension_semantics<parallel>], iteration_bounds = array<i64: 2>, scalar_prefetch = 0 : i64, scratch_operands = 0 : i64, tpu.core_type = #tpu.core_type<tc>, window_params = [{transform_indices = @transform_0, window_bounds = array<i64: 8, 32>}, {pipeline_mode = #tpu.pipeline_mode<synchronous>, transform_indices = @transform_1, window_bounds = array<i64: 32, 128>}, {pipeline_mode = #tpu.pipeline_mode<synchronous>, transform_indices = @transform_2, window_bounds = array<i64: 1, 128>}, {pipeline_mode = #tpu.pipeline_mode<synchronous>, transform_indices = @transform_3, window_bounds = array<i64: 1, 128>}, {pipeline_mode = #tpu.pipeline_mode<synchronous>, transform_indices = @transform_4, window_bounds = array<i64: 128, 128>}, {pipeline_mode = #tpu.pipeline_mode<synchronous>, transform_indices = @transform_5, window_bounds = array<i64: 1, 128>}, {pipeline_mode = #tpu.pipeline_mode<synchronous>, transform_indices = @transform_6, window_bounds = array<i64: 1, 128>}, {pipeline_mode = #tpu.pipeline_mode<synchronous>, transform_indices = @transform_7, window_bounds = array<i64: 128, 128>}, {pipeline_mode = #tpu.pipeline_mode<synchronous>, transform_indices = @transform_8, window_bounds = array<i64: 1, 128>}, {pipeline_mode = #tpu.pipeline_mode<synchronous>, transform_indices = @transform_9, window_bounds = array<i64: 1, 128>}, {pipeline_mode = #tpu.pipeline_mode<synchronous>, transform_indices = @transform_10, window_bounds = array<i64: 128, 32>}, {pipeline_mode = #tpu.pipeline_mode<synchronous>, transform_indices = @transform_11, window_bounds = array<i64: 1, 32>}, {transform_indices = @transform_12, window_bounds = array<i64: 8, 32>}]} {
    %c0 = arith.constant 0 : index
    %c0_0 = arith.constant 0 : index
    %0 = vector.load %arg1[%c0, %c0_0] : memref<8x32xf32, #tpu.memory_space<vmem>>, vector<8x32xf32>
    %c0_1 = arith.constant 0 : index
    %c0_2 = arith.constant 0 : index
    %1 = vector.load %arg2[%c0_1, %c0_2] : memref<32x128xf32, #tpu.memory_space<vmem>>, vector<32x128xf32>
    %cst = arith.constant dense<0.000000e+00> : vector<8x128xf32>
    %2 = tpu.matmul %0, %1, %cst {dimension_numbers = #tpu.dot_dimension_numbers<[1], [0], [0], [1], [0, 0, 1, 1], [], []>} : vector<8x32xf32>, vector<32x128xf32>, vector<8x128xf32> -> vector<8x128xf32>
    %c0_3 = arith.constant 0 : index
    %c0_4 = arith.constant 0 : index
    %3 = vector.load %arg3[%c0_3, %c0_4] : memref<1x128xf32, #tpu.memory_space<vmem>>, vector<1x128xf32>
    %4 = vector.broadcast %3 : vector<1x128xf32> to vector<8x128xf32>
    %5 = arith.addf %2, %4 : vector<8x128xf32>
    %c0_5 = arith.constant 0 : index
    %c0_6 = arith.constant 0 : index
    %6 = vector.load %arg4[%c0_5, %c0_6] : memref<1x128xf32, #tpu.memory_space<vmem>>, vector<1x128xf32>
    %cst_7 = arith.constant 0.000000e+00 : f32
    %7 = vector.broadcast %cst_7 : f32 to vector<8x128xf32>
    %8 = arith.cmpf oge, %5, %7 : vector<8x128xf32>
    %9 = vector.broadcast %6 : vector<1x128xf32> to vector<8x128xf32>
    %10 = arith.mulf %5, %9 : vector<8x128xf32>
    %11 = arith.select %8, %5, %10 : vector<8x128xi1>, vector<8x128xf32>
    %c0_8 = arith.constant 0 : index
    %c0_9 = arith.constant 0 : index
    %12 = vector.load %arg5[%c0_8, %c0_9] : memref<128x128xf32, #tpu.memory_space<vmem>>, vector<128x128xf32>
    %cst_10 = arith.constant dense<0.000000e+00> : vector<8x128xf32>
    %13 = tpu.matmul %11, %12, %cst_10 {dimension_numbers = #tpu.dot_dimension_numbers<[1], [0], [0], [1], [0, 0, 1, 1], [], []>} : vector<8x128xf32>, vector<128x128xf32>, vector<8x128xf32> -> vector<8x128xf32>
    %c0_11 = arith.constant 0 : index
    %c0_12 = arith.constant 0 : index
    %14 = vector.load %arg6[%c0_11, %c0_12] : memref<1x128xf32, #tpu.memory_space<vmem>>, vector<1x128xf32>
    %15 = vector.broadcast %14 : vector<1x128xf32> to vector<8x128xf32>
    %16 = arith.addf %13, %15 : vector<8x128xf32>
    %c0_13 = arith.constant 0 : index
    %c0_14 = arith.constant 0 : index
    %17 = vector.load %arg7[%c0_13, %c0_14] : memref<1x128xf32, #tpu.memory_space<vmem>>, vector<1x128xf32>
    %cst_15 = arith.constant 0.000000e+00 : f32
    %18 = vector.broadcast %cst_15 : f32 to vector<8x128xf32>
    %19 = arith.cmpf oge, %16, %18 : vector<8x128xf32>
    %20 = vector.broadcast %17 : vector<1x128xf32> to vector<8x128xf32>
    %21 = arith.mulf %16, %20 : vector<8x128xf32>
    %22 = arith.select %19, %16, %21 : vector<8x128xi1>, vector<8x128xf32>
    %c0_16 = arith.constant 0 : index
    %c0_17 = arith.constant 0 : index
    %23 = vector.load %arg8[%c0_16, %c0_17] : memref<128x128xf32, #tpu.memory_space<vmem>>, vector<128x128xf32>
    %cst_18 = arith.constant dense<0.000000e+00> : vector<8x128xf32>
    %24 = tpu.matmul %22, %23, %cst_18 {dimension_numbers = #tpu.dot_dimension_numbers<[1], [0], [0], [1], [0, 0, 1, 1], [], []>} : vector<8x128xf32>, vector<128x128xf32>, vector<8x128xf32> -> vector<8x128xf32>
    %c0_19 = arith.constant 0 : index
    %c0_20 = arith.constant 0 : index
    %25 = vector.load %arg9[%c0_19, %c0_20] : memref<1x128xf32, #tpu.memory_space<vmem>>, vector<1x128xf32>
    %26 = vector.broadcast %25 : vector<1x128xf32> to vector<8x128xf32>
    %27 = arith.addf %24, %26 : vector<8x128xf32>
    %c0_21 = arith.constant 0 : index
    %c0_22 = arith.constant 0 : index
    %28 = vector.load %arg10[%c0_21, %c0_22] : memref<1x128xf32, #tpu.memory_space<vmem>>, vector<1x128xf32>
    %cst_23 = arith.constant 0.000000e+00 : f32
    %29 = vector.broadcast %cst_23 : f32 to vector<8x128xf32>
    %30 = arith.cmpf oge, %27, %29 : vector<8x128xf32>
    %31 = vector.broadcast %28 : vector<1x128xf32> to vector<8x128xf32>
    %32 = arith.mulf %27, %31 : vector<8x128xf32>
    %33 = arith.select %30, %27, %32 : vector<8x128xi1>, vector<8x128xf32>
    %c0_24 = arith.constant 0 : index
    %c0_25 = arith.constant 0 : index
    %34 = vector.load %arg11[%c0_24, %c0_25] : memref<128x32xf32, #tpu.memory_space<vmem>>, vector<128x32xf32>
    %cst_26 = arith.constant dense<0.000000e+00> : vector<8x32xf32>
    %35 = tpu.matmul %33, %34, %cst_26 {dimension_numbers = #tpu.dot_dimension_numbers<[1], [0], [0], [1], [0, 0, 1, 1], [], []>} : vector<8x128xf32>, vector<128x32xf32>, vector<8x32xf32> -> vector<8x32xf32>
    %c0_27 = arith.constant 0 : index
    %c0_28 = arith.constant 0 : index
    %36 = vector.load %arg12[%c0_27, %c0_28] : memref<1x32xf32, #tpu.memory_space<vmem>>, vector<1x32xf32>
    %37 = vector.broadcast %36 : vector<1x32xf32> to vector<8x32xf32>
    %38 = arith.addf %35, %37 : vector<8x32xf32>
    %c0_29 = arith.constant 0 : index
    %c0_30 = arith.constant 0 : index
    %39 = vector.load %arg13[%c0_29, %c0_30] : memref<8x32xf32, #tpu.memory_space<vmem>>, vector<8x32xf32>
    tpu.vector_store %arg13[%c0_29, %c0_30], %38 {strides = array<i32>} : memref<8x32xf32, #tpu.memory_space<vmem>>, vector<8x32xf32>,
    return
  }
  func.func @transform_0(%arg0: i32) -> (i32, i32) {
    %c0_i32 = arith.constant 0 : i32
    %c0_i32_0 = arith.constant 0 : i32
    return %arg0, %c0_i32 : i32, i32
  }
  func.func @transform_1(%arg0: i32) -> (i32, i32) {
    %c0_i32 = arith.constant 0 : i32
    %c0_i32_0 = arith.constant 0 : i32
    %c0_i32_1 = arith.constant 0 : i32
    return %c0_i32, %c0_i32_0 : i32, i32
  }
  func.func @transform_2(%arg0: i32) -> (i32, i32) {
    %c0_i32 = arith.constant 0 : i32
    %c0_i32_0 = arith.constant 0 : i32
    %c0_i32_1 = arith.constant 0 : i32
    return %c0_i32, %c0_i32_0 : i32, i32
  }
  func.func @transform_3(%arg0: i32) -> (i32, i32) {
    %c0_i32 = arith.constant 0 : i32
    %c0_i32_0 = arith.constant 0 : i32
    %c0_i32_1 = arith.constant 0 : i32
    return %c0_i32, %c0_i32_0 : i32, i32
  }
  func.func @transform_4(%arg0: i32) -> (i32, i32) {
    %c0_i32 = arith.constant 0 : i32
    %c0_i32_0 = arith.constant 0 : i32
    %c0_i32_1 = arith.constant 0 : i32
    return %c0_i32, %c0_i32_0 : i32, i32
  }
  func.func @transform_5(%arg0: i32) -> (i32, i32) {
    %c0_i32 = arith.constant 0 : i32
    %c0_i32_0 = arith.constant 0 : i32
    %c0_i32_1 = arith.constant 0 : i32
    return %c0_i32, %c0_i32_0 : i32, i32
  }
  func.func @transform_6(%arg0: i32) -> (i32, i32) {
    %c0_i32 = arith.constant 0 : i32
    %c0_i32_0 = arith.constant 0 : i32
    %c0_i32_1 = arith.constant 0 : i32
    return %c0_i32, %c0_i32_0 : i32, i32
  }
  func.func @transform_7(%arg0: i32) -> (i32, i32) {
    %c0_i32 = arith.constant 0 : i32
    %c0_i32_0 = arith.constant 0 : i32
    %c0_i32_1 = arith.constant 0 : i32
    return %c0_i32, %c0_i32_0 : i32, i32
  }
  func.func @transform_8(%arg0: i32) -> (i32, i32) {
    %c0_i32 = arith.constant 0 : i32
    %c0_i32_0 = arith.constant 0 : i32
    %c0_i32_1 = arith.constant 0 : i32
    return %c0_i32, %c0_i32_0 : i32, i32
  }
  func.func @transform_9(%arg0: i32) -> (i32, i32) {
    %c0_i32 = arith.constant 0 : i32
    %c0_i32_0 = arith.constant 0 : i32
    %c0_i32_1 = arith.constant 0 : i32
    return %c0_i32, %c0_i32_0 : i32, i32
  }
  func.func @transform_10(%arg0: i32) -> (i32, i32) {
    %c0_i32 = arith.constant 0 : i32
    %c0_i32_0 = arith.constant 0 : i32
    %c0_i32_1 = arith.constant 0 : i32
    return %c0_i32, %c0_i32_0 : i32, i32
  }
  func.func @transform_11(%arg0: i32) -> (i32, i32) {
    %c0_i32 = arith.constant 0 : i32
    %c0_i32_0 = arith.constant 0 : i32
    %c0_i32_1 = arith.constant 0 : i32
    return %c0_i32, %c0_i32_0 : i32, i32
  }
  func.func @transform_12(%arg0: i32) -> (i32, i32) {
    %c0_i32 = arith.constant 0 : i32
    %c0_i32_0 = arith.constant 0 : i32
    return %arg0, %c0_i32 : i32, i32
  }
}

</mosaic_0001>

<llo_original>
// kernel: tpu_custom_call.1
$region0: #{tpu_custom_call.1}
  #allocation0 [shape = 'u32[]', space=smem, size = 0x4, offset = 0x4, fixed_abs, tag = 'smem constant byte address 0x4 - core index']
  #allocation1 [shape = 'u32[72,128]{1,0:T(1,128)}', space=vmem, size = 0x9000, scoped, tag = 'internal scratch']
  %s0 = inlined_call_operand.hbm [shape: f32[16,32], index: 0, kind: input, shape index: {}]
  %s1 = inlined_call_operand.vmem [shape: f32[32,128], index: 1, kind: input, shape index: {}]
  %s2 = inlined_call_operand.vmem [shape: f32[1,128], index: 2, kind: input, shape index: {}]
  %s3 = inlined_call_operand.vmem [shape: f32[1,128], index: 3, kind: input, shape index: {}]
  %s4 = inlined_call_operand.vmem [shape: f32[128,128], index: 4, kind: input, shape index: {}]
  %s5 = inlined_call_operand.vmem [shape: f32[1,128], index: 5, kind: input, shape index: {}]
  %s6 = inlined_call_operand.vmem [shape: f32[1,128], index: 6, kind: input, shape index: {}]
  %s7 = inlined_call_operand.hbm [shape: f32[128,128], index: 7, kind: input, shape index: {}]
  %s8 = inlined_call_operand.vmem [shape: f32[1,128], index: 8, kind: input, shape index: {}]
  %s9 = inlined_call_operand.vmem [shape: f32[1,128], index: 9, kind: input, shape index: {}]
  %s10 = inlined_call_operand.vmem [shape: f32[128,32], index: 10, kind: input, shape index: {}]
  %s11 = inlined_call_operand.vmem [shape: f32[1,32], index: 11, kind: input, shape index: {}]
  %s12 = inlined_call_operand.hbm [shape: f32[16,32], index: 12, kind: output, shape index: {}]
  %s13 = sld [smem:[#allocation0]]
  $region89: #{tpu_custom_call.1} parent=0
    _
  %s15 = ssub.s32 1, %s13
  %s16 = scalar_select 0, %s15, %s13
  $region1: #{tpu_custom_call.1} parent=0
    #allocation2 [shape = 'u8[8192]{0}', space=vmem, size = 0x2000, scoped, tag = 'input window, operand 0']
    #allocation3 [shape = 's32[2]{0}', space=sflag, size = 0x8, scoped, tag = 'scoped memory for tpu_custom_call.1']
    #allocation4 [shape = 's32[2]{0}', space=sflag, size = 0x8, scoped, tag = 'scoped memory for tpu_custom_call.1']
    #allocation5 [shape = 'u8[65536]{0}', space=vmem, size = 0x10000, scoped, tag = 'input window, operand 7, single buffered']
    #allocation6 [shape = 's32[1]{0}', space=sflag, size = 0x4, scoped, tag = 'scoped memory for tpu_custom_call.1']
    #allocation7 [shape = 'u8[8192]{0}', space=vmem, size = 0x2000, scoped, tag = 'output window, operand 0']
    %17 = vsyncpa [#allocation3], 0
    %s18 = scalar_lea.sflag [#allocation3], 1
    %19 = vsyncpa %s18, 0
    %20 = vsyncpa [#allocation6], 0
    %21 = vsyncpa [#allocation4], 0
    %s22 = scalar_lea.sflag [#allocation4], 1
    %23 = vsyncpa %s22, 0
    loop: start=0, step=1, limit=4
    $region2: #{tpu_custom_call.1} parent=1 // loop_pre_header
      _
    $region3: #{tpu_custom_call.1} parent=1 // loop_header
      %s25 = sphi 0, %s29
      %p26 = scmp.ge.s32.totalorder %s25, 4
      %s35 = sphi 0, %s37
      %s38 = sphi 0, %s35
      %s39 = sphi 0, %s38
      %s55 = sphi 0, %s39
      %s59 = sphi 0, %s59
      %s61 = sphi 0, %s59
      %s62 = sphi 0, %s61
      %s76 = sphi 0, %s62
      %s80 = sphi 0, %s80
      %s82 = sphi 0, %s80
      %s83 = sphi 0, %s82
      %s97 = sphi 0, %s83
      %s101 = sphi 0, %s101
      %s103 = sphi 0, %s101
      %s104 = sphi 0, %s103
      %s118 = sphi 0, %s104
      %s122 = sphi 0, %s122
      %s124 = sphi 0, %s122
      %s125 = sphi 0, %s124
      %s139 = sphi 0, %s125
      %s143 = sphi 0, %s143
      %s145 = sphi 0, %s143
      %s146 = sphi 0, %s145
      %s160 = sphi 0, %s146
      %s164 = sphi 0, %s164
      %s166 = sphi 0, %s164
      %s167 = sphi 0, %s166
      %s181 = sphi 0, %s167
      %s185 = sphi 0, %s185
      %s187 = sphi 0, %s185
      %s188 = sphi 0, %s187
      %s202 = sphi 0, %s188
      %s206 = sphi 0, %s206
      %s208 = sphi 0, %s206
      %s209 = sphi 0, %s208
      %s223 = sphi 0, %s209
      %s227 = sphi 0, %s227
      %s229 = sphi 0, %s227
      %s230 = sphi 0, %s229
      %s244 = sphi 0, %s230
      %s248 = sphi 0, %s248
      %s250 = sphi 0, %s248
      %s251 = sphi 0, %s250
      %s265 = sphi 0, %s251
      %s269 = sphi 0, %s269
      %s271 = sphi 0, %s269
      %s272 = sphi 0, %s271
      %s286 = sphi 0, %s272
      %s292 = sphi 0, %s294
      %s295 = sphi 0, %s292
      %s296 = sphi 0, %s295
      %s312 = sphi 0, %s296
    $region4: #{tpu_custom_call.1} parent=1 // loop_header_branch
      %28 = sbr.rel (%p26) target = $region8
    $region5: #{tpu_custom_call.1} parent=1 // loop_body
      %s30 = ssub.s32 %s25, 1
      %s31 = ssub.s32 %s25, 2
      %s32 = sadd.s32 %s25, 1
      %s33 = ssub.s32 %s25, %s32
      %p34 = scmp.eq.s32.totalorder %s33, 0
      %s36 = sadd.s32 %s35, 1
      %s37 = scalar_select %p34, %s35, %s36
      %p40 = pneg %p34
      %p41 = scmp.eq.s32.totalorder %s25, 1
      %p42 = por %p40, %p41
      %p43 = scmp.ne.s32.totalorder %s35, %s38
      %p44 = scmp.eq.s32.totalorder %s25, 0
      %p45 = por %p43, %p44
      %p46 = scmp.ne.s32.totalorder %s35, %s38
      %p47 = scmp.eq.s32.totalorder %s30, 1
      %p48 = por %p46, %p47
      %p49 = scmp.ne.s32.totalorder %s38, %s39
      %p50 = scmp.eq.s32.totalorder %s30, 0
      %p51 = por %p49, %p50
      %p52 = scmp.ne.s32.totalorder %s38, %s39
      %p53 = scmp.eq.s32.totalorder %s31, 1
      %p54 = por %p52, %p53
      %p56 = scmp.ne.s32.totalorder %s39, %s55
      %p57 = scmp.eq.s32.totalorder %s31, 0
      %p58 = por %p56, %p57
      %s60 = sadd.s32 %s59, 1
      %p63 = scmp.eq.s32.totalorder %s25, 1
      %p64 = scmp.ne.s32.totalorder %s59, %s61
      %p65 = scmp.eq.s32.totalorder %s25, 0
      %p66 = por %p64, %p65
      %p67 = scmp.ne.s32.totalorder %s59, %s61
      %p68 = scmp.eq.s32.totalorder %s30, 1
      %p69 = por %p67, %p68
      %p70 = scmp.ne.s32.totalorder %s61, %s62
      %p71 = scmp.eq.s32.totalorder %s30, 0
      %p72 = por %p70, %p71
      %p73 = scmp.ne.s32.totalorder %s61, %s62
      %p74 = scmp.eq.s32.totalorder %s31, 1
      %p75 = por %p73, %p74
      %p77 = scmp.ne.s32.totalorder %s62, %s76
      %p78 = scmp.eq.s32.totalorder %s31, 0
      %p79 = por %p77, %p78
      %s81 = sadd.s32 %s80, 1
      %p84 = scmp.eq.s32.totalorder %s25, 1
      %p85 = scmp.ne.s32.totalorder %s80, %s82
      %p86 = scmp.eq.s32.totalorder %s25, 0
      %p87 = por %p85, %p86
      %p88 = scmp.ne.s32.totalorder %s80, %s82
      %p89 = scmp.eq.s32.totalorder %s30, 1
      %p90 = por %p88, %p89
      %p91 = scmp.ne.s32.totalorder %s82, %s83
      %p92 = scmp.eq.s32.totalorder %s30, 0
      %p93 = por %p91, %p92
      %p94 = scmp.ne.s32.totalorder %s82, %s83
      %p95 = scmp.eq.s32.totalorder %s31, 1
      %p96 = por %p94, %p95
      %p98 = scmp.ne.s32.totalorder %s83, %s97
      %p99 = scmp.eq.s32.totalorder %s31, 0
      %p100 = por %p98, %p99
      %s102 = sadd.s32 %s101, 1
      %p105 = scmp.eq.s32.totalorder %s25, 1
      %p106 = scmp.ne.s32.totalorder %s101, %s103
      %p107 = scmp.eq.s32.totalorder %s25, 0
      %p108 = por %p106, %p107
      %p109 = scmp.ne.s32.totalorder %s101, %s103
      %p110 = scmp.eq.s32.totalorder %s30, 1
      %p111 = por %p109, %p110
      %p112 = scmp.ne.s32.totalorder %s103, %s104
      %p113 = scmp.eq.s32.totalorder %s30, 0
      %p114 = por %p112, %p113
      %p115 = scmp.ne.s32.totalorder %s103, %s104
      %p116 = scmp.eq.s32.totalorder %s31, 1
      %p117 = por %p115, %p116
      %p119 = scmp.ne.s32.totalorder %s104, %s118
      %p120 = scmp.eq.s32.totalorder %s31, 0
      %p121 = por %p119, %p120
      %s123 = sadd.s32 %s122, 1
      %p126 = scmp.eq.s32.totalorder %s25, 1
      %p127 = scmp.ne.s32.totalorder %s122, %s124
      %p128 = scmp.eq.s32.totalorder %s25, 0
      %p129 = por %p127, %p128
      %p130 = scmp.ne.s32.totalorder %s122, %s124
      %p131 = scmp.eq.s32.totalorder %s30, 1
      %p132 = por %p130, %p131
      %p133 = scmp.ne.s32.totalorder %s124, %s125
      %p134 = scmp.eq.s32.totalorder %s30, 0
      %p135 = por %p133, %p134
      %p136 = scmp.ne.s32.totalorder %s124, %s125
      %p137 = scmp.eq.s32.totalorder %s31, 1
      %p138 = por %p136, %p137
      %p140 = scmp.ne.s32.totalorder %s125, %s139
      %p141 = scmp.eq.s32.totalorder %s31, 0
      %p142 = por %p140, %p141
      %s144 = sadd.s32 %s143, 1
      %p147 = scmp.eq.s32.totalorder %s25, 1
      %p148 = scmp.ne.s32.totalorder %s143, %s145
      %p149 = scmp.eq.s32.totalorder %s25, 0
      %p150 = por %p148, %p149
      %p151 = scmp.ne.s32.totalorder %s143, %s145
      %p152 = scmp.eq.s32.totalorder %s30, 1
      %p153 = por %p151, %p152
      %p154 = scmp.ne.s32.totalorder %s145, %s146
      %p155 = scmp.eq.s32.totalorder %s30, 0
      %p156 = por %p154, %p155
      %p157 = scmp.ne.s32.totalorder %s145, %s146
      %p158 = scmp.eq.s32.totalorder %s31, 1
      %p159 = por %p157, %p158
      %p161 = scmp.ne.s32.totalorder %s146, %s160
      %p162 = scmp.eq.s32.totalorder %s31, 0
      %p163 = por %p161, %p162
      %s165 = sadd.s32 %s164, 1
      %p168 = scmp.eq.s32.totalorder %s25, 1
      %p169 = scmp.ne.s32.totalorder %s164, %s166
      %p170 = scmp.eq.s32.totalorder %s25, 0
      %p171 = por %p169, %p170
      %p172 = scmp.ne.s32.totalorder %s164, %s166
      %p173 = scmp.eq.s32.totalorder %s30, 1
      %p174 = por %p172, %p173
      %p175 = scmp.ne.s32.totalorder %s166, %s167
      %p176 = scmp.eq.s32.totalorder %s30, 0
      %p177 = por %p175, %p176
      %p178 = scmp.ne.s32.totalorder %s166, %s167
      %p179 = scmp.eq.s32.totalorder %s31, 1
      %p180 = por %p178, %p179
      %p182 = scmp.ne.s32.totalorder %s167, %s181
      %p183 = scmp.eq.s32.totalorder %s31, 0
      %p184 = por %p182, %p183
      %s186 = sadd.s32 %s185, 1
      %p189 = scmp.eq.s32.totalorder %s25, 1
      %p190 = scmp.ne.s32.totalorder %s185, %s187
      %p191 = scmp.eq.s32.totalorder %s25, 0
      %p192 = por %p190, %p191
      %p193 = scmp.ne.s32.totalorder %s185, %s187
      %p194 = scmp.eq.s32.totalorder %s30, 1
      %p195 = por %p193, %p194
      %p196 = scmp.ne.s32.totalorder %s187, %s188
      %p197 = scmp.eq.s32.totalorder %s30, 0
      %p198 = por %p196, %p197
      %p199 = scmp.ne.s32.totalorder %s187, %s188
      %p200 = scmp.eq.s32.totalorder %s31, 1
      %p201 = por %p199, %p200
      %p203 = scmp.ne.s32.totalorder %s188, %s202
      %p204 = scmp.eq.s32.totalorder %s31, 0
      %p205 = por %p203, %p204
      %s207 = sadd.s32 %s206, 1
      %p210 = scmp.eq.s32.totalorder %s25, 1
      %p211 = scmp.ne.s32.totalorder %s206, %s208
      %p212 = scmp.eq.s32.totalorder %s25, 0
      %p213 = por %p211, %p212
      %p214 = scmp.ne.s32.totalorder %s206, %s208
      %p215 = scmp.eq.s32.totalorder %s30, 1
      %p216 = por %p214, %p215
      %p217 = scmp.ne.s32.totalorder %s208, %s209
      %p218 = scmp.eq.s32.totalorder %s30, 0
      %p219 = por %p217, %p218
      %p220 = scmp.ne.s32.totalorder %s208, %s209
      %p221 = scmp.eq.s32.totalorder %s31, 1
      %p222 = por %p220, %p221
      %p224 = scmp.ne.s32.totalorder %s209, %s223
      %p225 = scmp.eq.s32.totalorder %s31, 0
      %p226 = por %p224, %p225
      %s228 = sadd.s32 %s227, 1
      %p231 = scmp.eq.s32.totalorder %s25, 1
      %p232 = scmp.ne.s32.totalorder %s227, %s229
      %p233 = scmp.eq.s32.totalorder %s25, 0
      %p234 = por %p232, %p233
      %p235 = scmp.ne.s32.totalorder %s227, %s229
      %p236 = scmp.eq.s32.totalorder %s30, 1
      %p237 = por %p235, %p236
      %p238 = scmp.ne.s32.totalorder %s229, %s230
      %p239 = scmp.eq.s32.totalorder %s30, 0
      %p240 = por %p238, %p239
      %p241 = scmp.ne.s32.totalorder %s229, %s230
      %p242 = scmp.eq.s32.totalorder %s31, 1
      %p243 = por %p241, %p242
      %p245 = scmp.ne.s32.totalorder %s230, %s244
      %p246 = scmp.eq.s32.totalorder %s31, 0
      %p247 = por %p245, %p246
      %s249 = sadd.s32 %s248, 1
      %p252 = scmp.eq.s32.totalorder %s25, 1
      %p253 = scmp.ne.s32.totalorder %s248, %s250
      %p254 = scmp.eq.s32.totalorder %s25, 0
      %p255 = por %p253, %p254
      %p256 = scmp.ne.s32.totalorder %s248, %s250
      %p257 = scmp.eq.s32.totalorder %s30, 1
      %p258 = por %p256, %p257
      %p259 = scmp.ne.s32.totalorder %s250, %s251
      %p260 = scmp.eq.s32.totalorder %s30, 0
      %p261 = por %p259, %p260
      %p262 = scmp.ne.s32.totalorder %s250, %s251
      %p263 = scmp.eq.s32.totalorder %s31, 1
      %p264 = por %p262, %p263
      %p266 = scmp.ne.s32.totalorder %s251, %s265
      %p267 = scmp.eq.s32.totalorder %s31, 0
      %p268 = por %p266, %p267
      %s270 = sadd.s32 %s269, 1
      %p273 = scmp.eq.s32.totalorder %s25, 1
      %p274 = scmp.ne.s32.totalorder %s269, %s271
      %p275 = scmp.eq.s32.totalorder %s25, 0
      %p276 = por %p274, %p275
      %p277 = scmp.ne.s32.totalorder %s269, %s271
      %p278 = scmp.eq.s32.totalorder %s30, 1
      %p279 = por %p277, %p278
      %p280 = scmp.ne.s32.totalorder %s271, %s272
      %p281 = scmp.eq.s32.totalorder %s30, 0
      %p282 = por %p280, %p281
      %p283 = scmp.ne.s32.totalorder %s271, %s272
      %p284 = scmp.eq.s32.totalorder %s31, 1
      %p285 = por %p283, %p284
      %p287 = scmp.ne.s32.totalorder %s272, %s286
      %p288 = scmp.eq.s32.totalorder %s31, 0
      %p289 = por %p287, %p288
      %s290 = ssub.s32 %s25, %s32
      %p291 = scmp.eq.s32.totalorder %s290, 0
      %s293 = sadd.s32 %s292, 1
      %s294 = scalar_select %p291, %s292, %s293
      %p297 = pneg %p291
      %p298 = scmp.eq.s32.totalorder %s25, 1
      %p299 = por %p297, %p298
      %p300 = scmp.ne.s32.totalorder %s292, %s295
      %p301 = scmp.eq.s32.totalorder %s25, 0
      %p302 = por %p300, %p301
      %p303 = scmp.ne.s32.totalorder %s292, %s295
      %p304 = scmp.eq.s32.totalorder %s30, 1
      %p305 = por %p303, %p304
      %p306 = scmp.ne.s32.totalorder %s295, %s296
      %p307 = scmp.eq.s32.totalorder %s30, 0
      %p308 = por %p306, %p307
      %p309 = scmp.ne.s32.totalorder %s295, %s296
      %p310 = scmp.eq.s32.totalorder %s31, 1
      %p311 = por %p309, %p310
      %p313 = scmp.ne.s32.totalorder %s296, %s312
      %p314 = scmp.eq.s32.totalorder %s31, 0
      %p315 = por %p313, %p314
      %p316 = scmp.le.s32.totalorder 1, %s25
      %p317 = scmp.lt.s32.totalorder %s25, 3
      %p318 = pnand %p316, %p317
      %p319 = pneg %p318
      // Predicated region
      $region9: #{tpu_custom_call.1} parent=5 // pred_check
        _
      $region10: #{tpu_custom_call.1} parent=5 // pred_check_branch
        %321 = sbr.rel (%p318) target = $region12
      $region11: #{tpu_custom_call.1} parent=5 // pred_region
        %s322 = ssub.s32 %s25, 1
        // Predicated region
        $region13: #{tpu_custom_call.1} parent=11 // pred_check
          %p323 = pneg %p72
        $region14: #{tpu_custom_call.1} parent=11 // pred_check_branch
          %325 = sbr.rel (%p323) target = $region16
        $region15: #{tpu_custom_call.1} parent=11 // pred_region
          _
        $region16: #{tpu_custom_call.1} parent=11 // pred_fallthru
          _
        // Predicated region
        $region17: #{tpu_custom_call.1} parent=11 // pred_check
          %p326 = pneg %p93
        $region18: #{tpu_custom_call.1} parent=11 // pred_check_branch
          %328 = sbr.rel (%p326) target = $region20
        $region19: #{tpu_custom_call.1} parent=11 // pred_region
          _
        $region20: #{tpu_custom_call.1} parent=11 // pred_fallthru
          _
        // Predicated region
        $region21: #{tpu_custom_call.1} parent=11 // pred_check
          %p329 = pneg %p114
        $region22: #{tpu_custom_call.1} parent=11 // pred_check_branch
          %331 = sbr.rel (%p329) target = $region24
        $region23: #{tpu_custom_call.1} parent=11 // pred_region
          _
        $region24: #{tpu_custom_call.1} parent=11 // pred_fallthru
          _
        // Predicated region
        $region25: #{tpu_custom_call.1} parent=11 // pred_check
          %p332 = pneg %p135
        $region26: #{tpu_custom_call.1} parent=11 // pred_check_branch
          %334 = sbr.rel (%p332) target = $region28
        $region27: #{tpu_custom_call.1} parent=11 // pred_region
          _
        $region28: #{tpu_custom_call.1} parent=11 // pred_fallthru
          _
        // Predicated region
        $region29: #{tpu_custom_call.1} parent=11 // pred_check
          %p335 = pneg %p156
        $region30: #{tpu_custom_call.1} parent=11 // pred_check_branch
          %337 = sbr.rel (%p335) target = $region32
        $region31: #{tpu_custom_call.1} parent=11 // pred_region
          _
        $region32: #{tpu_custom_call.1} parent=11 // pred_fallthru
          _
        // Predicated region
        $region33: #{tpu_custom_call.1} parent=11 // pred_check
          %p338 = pneg %p177
        $region34: #{tpu_custom_call.1} parent=11 // pred_check_branch
          %340 = sbr.rel (%p338) target = $region36
        $region35: #{tpu_custom_call.1} parent=11 // pred_region
          _
        $region36: #{tpu_custom_call.1} parent=11 // pred_fallthru
          _
        // Predicated region
        $region37: #{tpu_custom_call.1} parent=11 // pred_check
          %p341 = pneg %p198
        $region38: #{tpu_custom_call.1} parent=11 // pred_check_branch
          %343 = sbr.rel (%p341) target = $region40
        $region39: #{tpu_custom_call.1} parent=11 // pred_region
          %345 = vsyncadd [#allocation6], 0
          %s346 = sshll.u32 %s7, 4
          %s347 = int_to_ptr.hbm [resolvable:$true] %s346
          %s348 = sshll.u32 [#allocation5], 4
          %s349 = int_to_ptr.vmem [resolvable:$true] %s348
          %354 = dma.hbm_to_vmem [thread:$0]  %s347, 2048, %s349, [#allocation6], 128, 128, 8
        $region40: #{tpu_custom_call.1} parent=11 // pred_fallthru
          _
        // Predicated region
        $region41: #{tpu_custom_call.1} parent=11 // pred_check
          %p355 = pneg %p219
        $region42: #{tpu_custom_call.1} parent=11 // pred_check_branch
          %357 = sbr.rel (%p355) target = $region44
        $region43: #{tpu_custom_call.1} parent=11 // pred_region
          _
        $region44: #{tpu_custom_call.1} parent=11 // pred_fallthru
          _
        // Predicated region
        $region45: #{tpu_custom_call.1} parent=11 // pred_check
          %p358 = pneg %p240
        $region46: #{tpu_custom_call.1} parent=11 // pred_check_branch
          %360 = sbr.rel (%p358) target = $region48
        $region47: #{tpu_custom_call.1} parent=11 // pred_region
          _
        $region48: #{tpu_custom_call.1} parent=11 // pred_fallthru
          _
        // Predicated region
        $region49: #{tpu_custom_call.1} parent=11 // pred_check
          %p361 = pneg %p261
        $region50: #{tpu_custom_call.1} parent=11 // pred_check_branch
          %363 = sbr.rel (%p361) target = $region52
        $region51: #{tpu_custom_call.1} parent=11 // pred_region
          _
        $region52: #{tpu_custom_call.1} parent=11 // pred_fallthru
          _
        // Predicated region
        $region53: #{tpu_custom_call.1} parent=11 // pred_check
          %p364 = pneg %p282
        $region54: #{tpu_custom_call.1} parent=11 // pred_check_branch
          %366 = sbr.rel (%p364) target = $region56
        $region55: #{tpu_custom_call.1} parent=11 // pred_region
          _
        $region56: #{tpu_custom_call.1} parent=11 // pred_fallthru
          _
      $region12: #{tpu_custom_call.1} parent=5 // pred_fallthru
        _
      %p367 = scmp.lt.s32.totalorder %s25, 2
      // Predicated region
      $region57: #{tpu_custom_call.1} parent=5 // pred_check
        %p368 = pneg %p367
      $region58: #{tpu_custom_call.1} parent=5 // pred_check_branch
        %370 = sbr.rel (%p368) target = $region60
      $region59: #{tpu_custom_call.1} parent=5 // pred_region
        // Predicated region
        $region61: #{tpu_custom_call.1} parent=59 // pred_check
          %p371 = pneg %p45
        $region62: #{tpu_custom_call.1} parent=59 // pred_check_branch
          %373 = sbr.rel (%p371) target = $region64
        $region63: #{tpu_custom_call.1} parent=59 // pred_region
          %s374 = sand.u32 %s35, 1
          %s375 = scalar_lea.sflag [#allocation3], %s374
          %s376 = sand.u32 %s35, 1
          %s377 = smul.addr %s376, 8
          %s378 = scalar_lea.vmem [#allocation2], %s377
          %380 = vsyncadd %s375, 0
          %s381 = smul.addr %s25, 8
          %s382 = scalar_lea.hbm %s0, %s381
          %s384 = sshll.u32 %s382, 4
          %s385 = int_to_ptr.hbm [resolvable:$true] %s384
          %s386 = sshll.u32 %s378, 4
          %s387 = int_to_ptr.vmem [resolvable:$true] %s386
          %389 = dma.hbm_to_vmem [thread:$0]  %s385, 128, %s387, %s375
        $region64: #{tpu_custom_call.1} parent=59 // pred_fallthru
          _
      $region60: #{tpu_custom_call.1} parent=5 // pred_fallthru
        _
      %p390 = scmp.le.s32.totalorder 1, %s25
      %p391 = scmp.lt.s32.totalorder %s25, 3
      %p392 = pnand %p390, %p391
      %p393 = pneg %p392
      // Predicated region
      $region65: #{tpu_custom_call.1} parent=5 // pred_check
        _
      $region66: #{tpu_custom_call.1} parent=5 // pred_check_branch
        %395 = sbr.rel (%p392) target = $region68
      $region67: #{tpu_custom_call.1} parent=5 // pred_region
        %s396 = ssub.s32 %s25, 1
        %s397 = sand.u32 %s38, 1
        %s398 = scalar_lea.sflag [#allocation3], %s397
        %s399 = sand.u32 %s38, 1
        %s400 = smul.addr %s399, 8
        %s401 = scalar_lea.vmem [#allocation2], %s400
        // Predicated region
        $region69: #{tpu_custom_call.1} parent=67 // pred_check
          %p402 = pneg %p51
        $region70: #{tpu_custom_call.1} parent=67 // pred_check_branch
          %404 = sbr.rel (%p402) target = $region72
        $region71: #{tpu_custom_call.1} parent=67 // pred_region
          %406 = dma.done %s398, 128
        $region72: #{tpu_custom_call.1} parent=67 // pred_fallthru
          _
        // Predicated region
        $region73: #{tpu_custom_call.1} parent=67 // pred_check
          %p407 = pneg %p198
        $region74: #{tpu_custom_call.1} parent=67 // pred_check_branch
          %409 = sbr.rel (%p407) target = $region76
        $region75: #{tpu_custom_call.1} parent=67 // pred_region
          %411 = dma.done [#allocation6], 2048
        $region76: #{tpu_custom_call.1} parent=67 // pred_fallthru
          _
        %s412 = sand.u32 %s38, 1
        %s413 = scalar_lea.sflag [#allocation3], %s412
        %s414 = sand.u32 %s38, 1
        %s415 = smul.addr %s414, 8
        %s416 = scalar_lea.vmem [#allocation2], %s415
        %p417 = pneg %p51
        %p418 = pneg %p48
        %p419 = pneg %p72
        %p420 = pneg %p69
        %p421 = pneg %p93
        %p422 = pneg %p90
        %p423 = pneg %p114
        %p424 = pneg %p111
        %p425 = pneg %p135
        %p426 = pneg %p132
        %p427 = pneg %p156
        %p428 = pneg %p153
        %p429 = pneg %p177
        %p430 = pneg %p174
        %p431 = pneg %p198
        %p432 = pneg %p195
        %p433 = pneg %p219
        %p434 = pneg %p216
        %p435 = pneg %p240
        %p436 = pneg %p237
        %p437 = pneg %p261
        %p438 = pneg %p258
        %p439 = pneg %p282
        %p440 = pneg %p279
        %p441 = pneg %p308
        %p442 = pneg %p305
        %s443 = sand.u32 %s295, 1
        %s444 = scalar_lea.sflag [#allocation4], %s443
        %s445 = sand.u32 %s295, 1
        %s446 = smul.addr %s445, 8
        %s447 = scalar_lea.vmem [#allocation7], %s446
        %v448 = vld [vmem:[%s401] sm:$0xff]
        %v449 = vld [vmem:[%s1] sm:$0xff]
        %v450 = vld [vmem:[%s1 + $0x8] sm:$0xff]
        %v451 = vld [vmem:[%s1 + $0x10] sm:$0xff]
        %v452 = vld [vmem:[%s1 + $0x18] sm:$0xff]
        %v453 = vld [vmem:[%s2] sm:$0x1]
        %v455 = vperm.slane %v453, 0
        %vm457 = vcmask 261120
        %v459 = vsel %vm457, %v448, 0
        %461 = vmatpush.msra.mxu0 0.0
        %462 = vmatpush.msra.mxu0 0.0
        %463 = vmatpush.msra.mxu0 0.0
        %464 = vmatpush.msra.mxu0 0.0
        %465 = vmatpush.msra.mxu0 0.0
        %466 = vmatpush.msra.mxu0 0.0
        %467 = vmatpush.msra.mxu0 0.0
        %468 = vmatpush.msra.mxu0 0.0
        %469 = vmatpush.msra.mxu0 0.0
        %470 = vmatpush.msra.mxu0 0.0
        %471 = vmatpush.msra.mxu0 0.0
        %472 = vmatpush.msra.mxu0 0.0
        %473 = vmatpush.msra.mxu0 %v452
        %474 = vmatpush.msra.mxu0 %v451
        %475 = vmatpush.msra.mxu0 %v450
        %476 = vmatpush.msra.mxu0 %v449
        %477 = vmatmul.f32.gmra.mxu0 %v459
        %v478 = vpop.f32.mrf.mxu0
        %v479 = vadd.f32 %v455, %v478
        %480 = vdwg.mxu0
        %v481 = vld [vmem:[%s3] sm:$0x1]
        %vm482 = vcmp.ge.f32.partialorder %v479, 0.0
        %v484 = vperm.slane %v481, 0
        %v486 = vmul.f32 %v479, %v484
        %v487 = vsel %vm482, %v479, %v486
        %v488 = vld [vmem:[%s4] sm:$0xff]
        %v489 = vld [vmem:[%s4 + $0x8] sm:$0xff]
        %v490 = vld [vmem:[%s4 + $0x10] sm:$0xff]
        %v491 = vld [vmem:[%s4 + $0x18] sm:$0xff]
        %v492 = vld [vmem:[%s4 + $0x20] sm:$0xff]
        %v493 = vld [vmem:[%s4 + $0x28] sm:$0xff]
        %v494 = vld [vmem:[%s4 + $0x30] sm:$0xff]
        %v495 = vld [vmem:[%s4 + $0x38] sm:$0xff]
        %v496 = vld [vmem:[%s4 + $0x40] sm:$0xff]
        %v497 = vld [vmem:[%s4 + $0x48] sm:$0xff]
        %v498 = vld [vmem:[%s4 + $0x50] sm:$0xff]
        %v499 = vld [vmem:[%s4 + $0x58] sm:$0xff]
        %v500 = vld [vmem:[%s4 + $0x60] sm:$0xff]
        %v501 = vld [vmem:[%s4 + $0x68] sm:$0xff]
        %v502 = vld [vmem:[%s4 + $0x70] sm:$0xff]
        %v503 = vld [vmem:[%s4 + $0x78] sm:$0xff]
        %v504 = vld [vmem:[%s5] sm:$0x1]
        %v506 = vperm.slane %v504, 0
        %508 = vmatpush.msra.mxu0 %v503
        %509 = vmatpush.msra.mxu0 %v502
        %510 = vmatpush.msra.mxu0 %v501
        %511 = vmatpush.msra.mxu0 %v500
        %512 = vmatpush.msra.mxu0 %v499
        %513 = vmatpush.msra.mxu0 %v498
        %514 = vmatpush.msra.mxu0 %v497
        %515 = vmatpush.msra.mxu0 %v496
        %516 = vmatpush.msra.mxu0 %v495
        %517 = vmatpush.msra.mxu0 %v494
        %518 = vmatpush.msra.mxu0 %v493
        %519 = vmatpush.msra.mxu0 %v492
        %520 = vmatpush.msra.mxu0 %v491
        %521 = vmatpush.msra.mxu0 %v490
        %522 = vmatpush.msra.mxu0 %v489
        %523 = vmatpush.msra.mxu0 %v488
        %524 = vmatmul.f32.gmra.mxu0 %v487
        %v525 = vpop.f32.mrf.mxu0
        %v526 = vadd.f32 %v506, %v525
        %527 = vdwg.mxu0
        %v528 = vld [vmem:[%s6] sm:$0x1]
        %vm529 = vcmp.ge.f32.partialorder %v526, 0.0
        %v531 = vperm.slane %v528, 0
        %v533 = vmul.f32 %v526, %v531
        %v534 = vsel %vm529, %v526, %v533
        %v535 = vld [vmem:[#allocation5] sm:$0xff]
        %v536 = vld [vmem:[#allocation5 + $0x8] sm:$0xff]
        %v537 = vld [vmem:[#allocation5 + $0x10] sm:$0xff]
        %v538 = vld [vmem:[#allocation5 + $0x18] sm:$0xff]
        %v539 = vld [vmem:[#allocation5 + $0x20] sm:$0xff]
        %v540 = vld [vmem:[#allocation5 + $0x28] sm:$0xff]
        %v541 = vld [vmem:[#allocation5 + $0x30] sm:$0xff]
        %v542 = vld [vmem:[#allocation5 + $0x38] sm:$0xff]
        %v543 = vld [vmem:[#allocation5 + $0x40] sm:$0xff]
        %v544 = vld [vmem:[#allocation5 + $0x48] sm:$0xff]
        %v545 = vld [vmem:[#allocation5 + $0x50] sm:$0xff]
        %v546 = vld [vmem:[#allocation5 + $0x58] sm:$0xff]
        %v547 = vld [vmem:[#allocation5 + $0x60] sm:$0xff]
        %v548 = vld [vmem:[#allocation5 + $0x68] sm:$0xff]
        %v549 = vld [vmem:[#allocation5 + $0x70] sm:$0xff]
        %v550 = vld [vmem:[#allocation5 + $0x78] sm:$0xff]
        %v551 = vld [vmem:[%s8] sm:$0x1]
        %v553 = vperm.slane %v551, 0
        %555 = vmatpush.msra.mxu0 %v550
        %556 = vmatpush.msra.mxu0 %v549
        %557 = vmatpush.msra.mxu0 %v548
        %558 = vmatpush.msra.mxu0 %v547
        %559 = vmatpush.msra.mxu0 %v546
        %560 = vmatpush.msra.mxu0 %v545
        %561 = vmatpush.msra.mxu0 %v544
        %562 = vmatpush.msra.mxu0 %v543
        %563 = vmatpush.msra.mxu0 %v542
        %564 = vmatpush.msra.mxu0 %v541
        %565 = vmatpush.msra.mxu0 %v540
        %566 = vmatpush.msra.mxu0 %v539
        %567 = vmatpush.msra.mxu0 %v538
        %568 = vmatpush.msra.mxu0 %v537
        %569 = vmatpush.msra.mxu0 %v536
        %570 = vmatpush.msra.mxu0 %v535
        %571 = vmatmul.f32.gmra.mxu0 %v534
        %v572 = vpop.f32.mrf.mxu0
        %v573 = vadd.f32 %v553, %v572
        %574 = vdwg.mxu0
        %v575 = vld [vmem:[%s9] sm:$0x1]
        %vm576 = vcmp.ge.f32.partialorder %v573, 0.0
        %v578 = vperm.slane %v575, 0
        %v580 = vmul.f32 %v573, %v578
        %v581 = vsel %vm576, %v573, %v580
        %v582 = vld [vmem:[%s10] sm:$0xff]
        %v583 = vld [vmem:[%s10 + $0x8] sm:$0xff]
        %v584 = vld [vmem:[%s10 + $0x10] sm:$0xff]
        %v585 = vld [vmem:[%s10 + $0x18] sm:$0xff]
        %v586 = vld [vmem:[%s10 + $0x20] sm:$0xff]
        %v587 = vld [vmem:[%s10 + $0x28] sm:$0xff]
        %v588 = vld [vmem:[%s10 + $0x30] sm:$0xff]
        %v589 = vld [vmem:[%s10 + $0x38] sm:$0xff]
        %v590 = vld [vmem:[%s10 + $0x40] sm:$0xff]
        %v591 = vld [vmem:[%s10 + $0x48] sm:$0xff]
        %v592 = vld [vmem:[%s10 + $0x50] sm:$0xff]
        %v593 = vld [vmem:[%s10 + $0x58] sm:$0xff]
        %v594 = vld [vmem:[%s10 + $0x60] sm:$0xff]
        %v595 = vld [vmem:[%s10 + $0x68] sm:$0xff]
        %v596 = vld [vmem:[%s10 + $0x70] sm:$0xff]
        %v597 = vld [vmem:[%s10 + $0x78] sm:$0xff]
        %v598 = vld [vmem:[%s11] sm:$0x1]
        %v600 = vperm.slane %v598, 0
        %602 = vmatpush.msra.mxu0 %v597
        %603 = vmatpush.msra.mxu0 %v596
        %604 = vmatpush.msra.mxu0 %v595
        %605 = vmatpush.msra.mxu0 %v594
        %606 = vmatpush.msra.mxu0 %v593
        %607 = vmatpush.msra.mxu0 %v592
        %608 = vmatpush.msra.mxu0 %v591
        %609 = vmatpush.msra.mxu0 %v590
        %610 = vmatpush.msra.mxu0 %v589
        %611 = vmatpush.msra.mxu0 %v588
        %612 = vmatpush.msra.mxu0 %v587
        %613 = vmatpush.msra.mxu0 %v586
        %614 = vmatpush.msra.mxu0 %v585
        %615 = vmatpush.msra.mxu0 %v584
        %616 = vmatpush.msra.mxu0 %v583
        %617 = vmatpush.msra.mxu0 %v582
        %618 = vmatmul.f32.gmra.mxu0 %v581
        %v619 = vpop.f32.mrf.mxu0
        %v620 = vadd.f32 %v600, %v619
        %621 = vdwg.mxu0
        %622 = vst.msk [vmem:[%s447] sm:$0xff] %vm457, %v620
        %s623 = sand.u32 %s295, 1
        %s624 = scalar_lea.sflag [#allocation4], %s623
        %s625 = sand.u32 %s295, 1
        %s626 = smul.addr %s625, 8
        %s627 = scalar_lea.vmem [#allocation7], %s626
        // Predicated region
        $region77: #{tpu_custom_call.1} parent=67 // pred_check
          %p628 = pneg %p305
        $region78: #{tpu_custom_call.1} parent=67 // pred_check_branch
          %630 = sbr.rel (%p628) target = $region80
        $region79: #{tpu_custom_call.1} parent=67 // pred_region
          %632 = vsyncadd %s624, 0
          %s633 = smul.addr %s30, 8
          %s634 = scalar_lea.hbm %s12, %s633
          %s636 = sshll.u32 %s627, 4
          %s637 = int_to_ptr.vmem [resolvable:$true] %s636
          %s638 = sshll.u32 %s634, 4
          %s639 = int_to_ptr.hbm [resolvable:$true] %s638
          %641 = dma.vmem_to_hbm [thread:$0]  %s637, 128, %s639, %s624
        $region80: #{tpu_custom_call.1} parent=67 // pred_fallthru
          _
      $region68: #{tpu_custom_call.1} parent=5 // pred_fallthru
        _
      %p642 = scmp.le.s32.totalorder 2, %s25
      // Predicated region
      $region81: #{tpu_custom_call.1} parent=5 // pred_check
        %p643 = pneg %p642
      $region82: #{tpu_custom_call.1} parent=5 // pred_check_branch
        %645 = sbr.rel (%p643) target = $region84
      $region83: #{tpu_custom_call.1} parent=5 // pred_region
        %s646 = ssub.s32 %s25, 2
        // Predicated region
        $region85: #{tpu_custom_call.1} parent=83 // pred_check
          %p647 = pneg %p311
        $region86: #{tpu_custom_call.1} parent=83 // pred_check_branch
          %649 = sbr.rel (%p647) target = $region88
        $region87: #{tpu_custom_call.1} parent=83 // pred_region
          %s650 = sand.u32 %s296, 1
          %s651 = scalar_lea.sflag [#allocation4], %s650
          %s652 = sand.u32 %s296, 1
          %s653 = smul.addr %s652, 8
          %s654 = scalar_lea.vmem [#allocation7], %s653
          %656 = dma.done %s651, 128
        $region88: #{tpu_custom_call.1} parent=83 // pred_fallthru
          _
      $region84: #{tpu_custom_call.1} parent=5 // pred_fallthru
        _
    $region6: #{tpu_custom_call.1} parent=1 // loop_footer
      %s29 = sadd.s32 1, %s25
    $region7: #{tpu_custom_call.1} parent=1 // loop_footer_branch
      %24 = sbr.rel target = $region3
    $region8: #{tpu_custom_call.1} parent=1 // loop_exit
      _
    %657 = vsyncpa [#allocation3], 1
    %s658 = scalar_lea.sflag [#allocation3], 1
    %659 = vsyncpa %s658, 1
    %660 = vsyncpa [#allocation6], 1
    %661 = vsyncpa [#allocation4], 1
    %s662 = scalar_lea.sflag [#allocation4], 1
    %663 = vsyncpa %s662, 1

</llo_original>
